<compile_context>
chip_gen: v5e
topology: v5e:2x2
jax: 0.10.0
libtpu: 0.0.40
codegen_flags: <defaults>
</compile_context>

<pallas_src>
import functools

import jax
import jax.numpy as jnp
from jax import lax
from jax.experimental import pallas as pl
from jax.experimental.pallas import tpu as pltpu


def dnn_kernel(x_ref, w1_ref, b1_ref, w2_ref, b2_ref, o_ref):
    # fc1 + ReLU.  Contract in_dim of both operands (x stays in native layout):
    #   (hidden, in_dim) . (tb, in_dim) -> (hidden, tb)
    h = lax.dot_general(
        w1_ref[...], x_ref[...],
        dimension_numbers=(((1,), (1,)), ((), ())),
        preferred_element_type=jnp.float32,
    )
    h = jnp.maximum(h + b1_ref[...], 0.0)
    # fc2: (out_dim, hidden) @ (hidden, tb) -> (out_dim, tb)
    y = jnp.dot(w2_ref[...], h, preferred_element_type=jnp.float32) + b2_ref[...]
    # Sigmoid: exp + reciprocal route to the (idle) EUP slot.
    o_ref[...] = jax.nn.sigmoid(y).astype(o_ref.dtype)


def _round_up(a, b):
    return ((a + b - 1) // b) * b


def _choose_batch_tile(batch, block_b):
    """Pick (tb, padded_batch). tb is a multiple of 128 and sized so that
    (a) per-step DMA amortizes the fixed grid-step overhead, (b) the VMEM
    footprint (~1.5 KB * tb) stays under the 32 MiB scoped limit, and
    (c) there are >= 2 grid steps whenever possible (v7x: 2 TensorCores)."""
    bp0 = _round_up(batch, 128)
    block_b = max(128, _round_up(block_b, 128))      # sanitize caller override
    n_steps = max(1, -(-bp0 // block_b))
    if bp0 >= 256:
        n_steps = max(n_steps, 2)                    # let megacore shard batch
    tb = _round_up(-(-bp0 // n_steps), 128)
    bp = _round_up(batch, tb)
    return tb, bp


@functools.partial(jax.jit, static_argnames=("block_b",))
def dnn_forward_pallas(x, w1, b1, w2, b2, *, block_b=16384):
    """x: (B, in_dim); w1: (hidden, in_dim); b1: (hidden,);
    w2: (out_dim, hidden); b2: (out_dim,). Returns (B, out_dim)."""
    B, in_dim = x.shape
    hidden = w1.shape[0]
    out_dim = w2.shape[0]

    tb, bp = _choose_batch_tile(B, block_b)

    # x keeps its native (rows, features) layout.  Only pad batch rows with
    # zeros when B is not a multiple of the tile (no-op copy when it divides).
    x_in = x.astype(jnp.float32)
    if bp != B:
        x_in = jnp.zeros((bp, in_dim), jnp.float32).at[:B, :].set(x_in)

    w1_c = w1.astype(jnp.float32)                       # (hidden, in_dim)
    b1_c = b1.reshape(hidden, 1).astype(jnp.float32)    # column vector
    w2_c = w2.astype(jnp.float32)                       # (out_dim, hidden)
    b2_c = b2.reshape(out_dim, 1).astype(jnp.float32)

    grid = (bp // tb,)
    flops = 2 * B * (in_dim * hidden + hidden * out_dim)
    bytes_accessed = 4 * (B * in_dim + B * out_dim
                          + hidden * in_dim + out_dim * hidden
                          + hidden + out_dim)

    out_t = pl.pallas_call(
        dnn_kernel,
        out_shape=jax.ShapeDtypeStruct((out_dim, bp), jnp.float32),
        grid=grid,
        in_specs=[
            # x tile streams per grid step, native layout (last dim == full).
            pl.BlockSpec((tb, in_dim), lambda i: (i, 0)),
            # Weights / biases: constant block index -> VMEM-resident.
            pl.BlockSpec((hidden, in_dim), lambda i: (0, 0)),
            pl.BlockSpec((hidden, 1), lambda i: (0, 0)),
            pl.BlockSpec((out_dim, hidden), lambda i: (0, 0)),
            pl.BlockSpec((out_dim, 1), lambda i: (0, 0)),
        ],
        # Lane-dense output tile: batch on the 128-lane axis -> unmasked stores.
        out_specs=pl.BlockSpec((out_dim, tb), lambda i: (0, i)),
        compiler_params=pltpu.CompilerParams(
            dimension_semantics=("parallel",),     # batch tiles are independent
            vmem_limit_bytes=32 * 1024 * 1024,     # ~24 MiB footprint at tb=16K
        ),
        cost_estimate=pl.CostEstimate(
            flops=flops,
            transcendentals=B * out_dim,
            bytes_accessed=bytes_accessed,
        ),
    )(x_in, w1_c, b1_c, w2_c, b2_c)

    # Tiny (out_dim, B) -> (B, out_dim) fixup; negligible vs the x stream.
    return out_t[:, :B].T


def dnn_reference(x, w1, b1, w2, b2):
    h = jnp.maximum(x @ w1.T + b1, 0.0)
    return jax.nn.sigmoid(h @ w2.T + b2)


@functools.partial(jax.jit, static_argnames=("block_b", "min_pallas_batch"))
def dnn_forward(x, w1, b1, w2, b2, *, block_b=16384, min_pallas_batch=2048):
    """Dispatcher: tiny batches skip the kernel (launch/pad overhead dominates
    and one 128-lane tile would be mostly padding)."""
    if x.shape[0] < min_pallas_batch:
        return dnn_reference(x, w1, b1, w2, b2)
    return dnn_forward_pallas(x, w1, b1, w2, b2, block_b=block_b)


def init_params(key, in_dim=12, hidden_dim=64, out_dim=2):
    k1, k2, k3, k4 = jax.random.split(key, 4)
    # PyTorch nn.Linear-style U(-1/sqrt(fan_in), 1/sqrt(fan_in)); weights in
    # PyTorch-native (out_features, in_features) layout.
    lim1 = 1.0 / jnp.sqrt(in_dim)
    lim2 = 1.0 / jnp.sqrt(hidden_dim)
    w1 = jax.random.uniform(k1, (hidden_dim, in_dim), jnp.float32, -lim1, lim1)
    b1 = jax.random.uniform(k2, (hidden_dim,), jnp.float32, -lim1, lim1)
    w2 = jax.random.uniform(k3, (out_dim, hidden_dim), jnp.float32, -lim2, lim2)
    b2 = jax.random.uniform(k4, (out_dim,), jnp.float32, -lim2, lim2)
    return w1, b1, w2, b2


if __name__ == "__main__":
    key = jax.random.PRNGKey(0)
    kx, kx2, kp = jax.random.split(key, 3)

    IN_DIM, HIDDEN, OUT = 12, 64, 2
    w1, b1, w2, b2 = init_params(kp, IN_DIM, HIDDEN, OUT)

    # 1) Tiny batch through the Pallas kernel (single 128-lane tile).
    B = 8
    x = jax.random.normal(kx, (B, IN_DIM), jnp.float32)
    out = jax.block_until_ready(dnn_forward_pallas(x, w1, b1, w2, b2))
    ref = dnn_reference(x, w1, b1, w2, b2)
    assert out.shape == (B, OUT)
    assert jnp.allclose(out, ref, atol=1e-5, rtol=1e-5)

    # 2) Ragged batch -> exercises batch padding, a 2-step grid (double-buffered
    #    x stream + megacore-shardable), and the lane-dense output writeback.
    B2 = 200
    x2 = jax.random.normal(kx2, (B2, IN_DIM), jnp.float32)
    out2 = jax.block_until_ready(dnn_forward_pallas(x2, w1, b1, w2, b2))
    ref2 = dnn_reference(x2, w1, b1, w2, b2)
    assert out2.shape == (B2, OUT)
    assert jnp.allclose(out2, ref2, atol=1e-5, rtol=1e-5)

    # Dispatcher sanity (takes the small-batch jnp fast path here).
    out3 = jax.block_until_ready(dnn_forward(x, w1, b1, w2, b2))
    assert jnp.allclose(out3, ref, atol=1e-5, rtol=1e-5)

    print("KERNEL_OK")
</pallas_src>

<mosaic_0001>
module attributes {stable_mosaic.version = 11 : i64} {
  func.func @dnn_kernel(%arg0: i32, %arg1: memref<128x12xf32, #tpu.memory_space<vmem>>, %arg2: memref<64x12xf32, #tpu.memory_space<vmem>>, %arg3: memref<64x1xf32, #tpu.memory_space<vmem>>, %arg4: memref<2x64xf32, #tpu.memory_space<vmem>>, %arg5: memref<2x1xf32, #tpu.memory_space<vmem>>, %arg6: memref<2x128xf32, #tpu.memory_space<vmem>>) attributes {dimension_semantics = [#tpu.dimension_semantics<parallel>], iteration_bounds = array<i64: 1>, scalar_prefetch = 0 : i64, scratch_operands = 0 : i64, tpu.core_type = #tpu.core_type<tc>, window_params = [{transform_indices = @transform_0, window_bounds = array<i64: 128, 12>}, {pipeline_mode = #tpu.pipeline_mode<synchronous>, transform_indices = @transform_1, window_bounds = array<i64: 64, 12>}, {pipeline_mode = #tpu.pipeline_mode<synchronous>, transform_indices = @transform_2, window_bounds = array<i64: 64, 1>}, {pipeline_mode = #tpu.pipeline_mode<synchronous>, transform_indices = @transform_3, window_bounds = array<i64: 2, 64>}, {pipeline_mode = #tpu.pipeline_mode<synchronous>, transform_indices = @transform_4, window_bounds = array<i64: 2, 1>}, {transform_indices = @transform_5, window_bounds = array<i64: 2, 128>}]} {
    %c0 = arith.constant 0 : index
    %c0_0 = arith.constant 0 : index
    %0 = vector.load %arg2[%c0, %c0_0] : memref<64x12xf32, #tpu.memory_space<vmem>>, vector<64x12xf32>
    %c0_1 = arith.constant 0 : index
    %c0_2 = arith.constant 0 : index
    %1 = vector.load %arg1[%c0_1, %c0_2] : memref<128x12xf32, #tpu.memory_space<vmem>>, vector<128x12xf32>
    %cst = arith.constant dense<0.000000e+00> : vector<64x128xf32>
    %2 = tpu.matmul %0, %1, %cst {dimension_numbers = #tpu.dot_dimension_numbers<[1], [1], [0], [0], [0, 0, 1, 0], [], []>} : vector<64x12xf32>, vector<128x12xf32>, vector<64x128xf32> -> vector<64x128xf32>
    %c0_3 = arith.constant 0 : index
    %c0_4 = arith.constant 0 : index
    %3 = vector.load %arg3[%c0_3, %c0_4] : memref<64x1xf32, #tpu.memory_space<vmem>>, vector<64x1xf32>
    %4 = vector.broadcast %3 : vector<64x1xf32> to vector<64x128xf32>
    %5 = arith.addf %2, %4 : vector<64x128xf32>
    %cst_5 = arith.constant 0.000000e+00 : f32
    %6 = vector.broadcast %cst_5 : f32 to vector<64x128xf32>
    %7 = arith.maximumf %5, %6 : vector<64x128xf32>
    %c0_6 = arith.constant 0 : index
    %c0_7 = arith.constant 0 : index
    %8 = vector.load %arg4[%c0_6, %c0_7] : memref<2x64xf32, #tpu.memory_space<vmem>>, vector<2x64xf32>
    %cst_8 = arith.constant dense<0.000000e+00> : vector<2x128xf32>
    %9 = tpu.matmul %8, %7, %cst_8 {dimension_numbers = #tpu.dot_dimension_numbers<[1], [0], [0], [1], [0, 0, 1, 1], [], []>} : vector<2x64xf32>, vector<64x128xf32>, vector<2x128xf32> -> vector<2x128xf32>
    %c0_9 = arith.constant 0 : index
    %c0_10 = arith.constant 0 : index
    %10 = vector.load %arg5[%c0_9, %c0_10] : memref<2x1xf32, #tpu.memory_space<vmem>>, vector<2x1xf32>
    %11 = vector.broadcast %10 : vector<2x1xf32> to vector<2x128xf32>
    %12 = arith.addf %9, %11 : vector<2x128xf32>
    %13 = arith.negf %12 : vector<2x128xf32>
    %14 = math.exp %13 : vector<2x128xf32>
    %cst_11 = arith.constant 1.000000e+00 : f32
    %15 = vector.broadcast %cst_11 : f32 to vector<2x128xf32>
    %16 = arith.addf %15, %14 : vector<2x128xf32>
    %17 = arith.divf %15, %16 : vector<2x128xf32>
    %c0_12 = arith.constant 0 : index
    %c0_13 = arith.constant 0 : index
    %18 = vector.load %arg6[%c0_12, %c0_13] : memref<2x128xf32, #tpu.memory_space<vmem>>, vector<2x128xf32>
    tpu.vector_store %arg6[%c0_12, %c0_13], %17 {strides = array<i32>} : memref<2x128xf32, #tpu.memory_space<vmem>>, vector<2x128xf32>,
    return
  }
  func.func @transform_0(%arg0: i32) -> (i32, i32) {
    %c0_i32 = arith.constant 0 : i32
    %c0_i32_0 = arith.constant 0 : i32
    return %arg0, %c0_i32 : i32, i32
  }
  func.func @transform_1(%arg0: i32) -> (i32, i32) {
    %c0_i32 = arith.constant 0 : i32
    %c0_i32_0 = arith.constant 0 : i32
    %c0_i32_1 = arith.constant 0 : i32
    return %c0_i32, %c0_i32_0 : i32, i32
  }
  func.func @transform_2(%arg0: i32) -> (i32, i32) {
    %c0_i32 = arith.constant 0 : i32
    %c0_i32_0 = arith.constant 0 : i32
    %c0_i32_1 = arith.constant 0 : i32
    return %c0_i32, %c0_i32_0 : i32, i32
  }
  func.func @transform_3(%arg0: i32) -> (i32, i32) {
    %c0_i32 = arith.constant 0 : i32
    %c0_i32_0 = arith.constant 0 : i32
    %c0_i32_1 = arith.constant 0 : i32
    return %c0_i32, %c0_i32_0 : i32, i32
  }
  func.func @transform_4(%arg0: i32) -> (i32, i32) {
    %c0_i32 = arith.constant 0 : i32
    %c0_i32_0 = arith.constant 0 : i32
    %c0_i32_1 = arith.constant 0 : i32
    return %c0_i32, %c0_i32_0 : i32, i32
  }
  func.func @transform_5(%arg0: i32) -> (i32, i32) {
    %c0_i32 = arith.constant 0 : i32
    %c0_i32_0 = arith.constant 0 : i32
    return %c0_i32, %arg0 : i32, i32
  }
}

</mosaic_0001>

<llo_original>
// kernel: dnn_forward_pallas.1
$region0: #{dnn_forward_pallas.1}
  #allocation0 [shape = 'u32[]', space=smem, size = 0x4, offset = 0x4, fixed_abs, tag = 'smem constant byte address 0x4 - core index']
  #allocation1 [shape = 'u32[72,128]{1,0:T(1,128)}', space=vmem, size = 0x9000, scoped, tag = 'internal scratch']
  %s0 = inlined_call_operand.vmem [shape: f32[128,12], index: 0, kind: input, shape index: {}]
  %s1 = inlined_call_operand.vmem [shape: f32[64,12], index: 1, kind: input, shape index: {}]
  %s2 = inlined_call_operand.vmem [shape: f32[64,1], index: 2, kind: input, shape index: {}]
  %s3 = inlined_call_operand.vmem [shape: f32[2,64], index: 3, kind: input, shape index: {}]
  %s4 = inlined_call_operand.vmem [shape: f32[2,1], index: 4, kind: input, shape index: {}]
  %s5 = inlined_call_operand.vmem [shape: f32[2,128], index: 5, kind: output, shape index: {}]
  %s6 = sld [smem:[#allocation0]]
  $region30: #{dnn_forward_pallas.1} parent=0
    _
  %s8 = ssub.s32 1, %s6
  %s9 = scalar_select 0, %s8, %s6
  // Predicated region
  $region2: #{dnn_forward_pallas.1} parent=0 // pred_check
    _
  $region3: #{dnn_forward_pallas.1} parent=0 // pred_check_branch
    %11 = sbr.rel (0) target = $region5
  $region4: #{dnn_forward_pallas.1} parent=0 // pred_region
    _
  $region5: #{dnn_forward_pallas.1} parent=0 // pred_fallthru
    _
  // Predicated region
  $region6: #{dnn_forward_pallas.1} parent=0 // pred_check
    _
  $region7: #{dnn_forward_pallas.1} parent=0 // pred_check_branch
    %13 = sbr.rel (0) target = $region9
  $region8: #{dnn_forward_pallas.1} parent=0 // pred_region
    _
  $region9: #{dnn_forward_pallas.1} parent=0 // pred_fallthru
    _
  // Predicated region
  $region10: #{dnn_forward_pallas.1} parent=0 // pred_check
    _
  $region11: #{dnn_forward_pallas.1} parent=0 // pred_check_branch
    %15 = sbr.rel (0) target = $region13
  $region12: #{dnn_forward_pallas.1} parent=0 // pred_region
    _
  $region13: #{dnn_forward_pallas.1} parent=0 // pred_fallthru
    _
  // Predicated region
  $region14: #{dnn_forward_pallas.1} parent=0 // pred_check
    _
  $region15: #{dnn_forward_pallas.1} parent=0 // pred_check_branch
    %17 = sbr.rel (0) target = $region17
  $region16: #{dnn_forward_pallas.1} parent=0 // pred_region
    _
  $region17: #{dnn_forward_pallas.1} parent=0 // pred_fallthru
    _
  // Predicated region
  $region18: #{dnn_forward_pallas.1} parent=0 // pred_check
    _
  $region19: #{dnn_forward_pallas.1} parent=0 // pred_check_branch
    %19 = sbr.rel (0) target = $region21
  $region20: #{dnn_forward_pallas.1} parent=0 // pred_region
    _
  $region21: #{dnn_forward_pallas.1} parent=0 // pred_fallthru
    _
  %v20 = vld [vmem:[%s1] sm:$0xff]
  %v21 = vld [vmem:[%s1 + $0x8] sm:$0xff]
  %v22 = vld [vmem:[%s1 + $0x10] sm:$0xff]
  %v23 = vld [vmem:[%s1 + $0x18] sm:$0xff]
  %v24 = vld [vmem:[%s1 + $0x20] sm:$0xff]
  %v25 = vld [vmem:[%s1 + $0x28] sm:$0xff]
  %v26 = vld [vmem:[%s1 + $0x30] sm:$0xff]
  %v27 = vld [vmem:[%s1 + $0x38] sm:$0xff]
  %v28 = vld [vmem:[%s0] sm:$0xff]
  %v29 = vld [vmem:[%s0 + $0x8] sm:$0xff]
  %v30 = vld [vmem:[%s0 + $0x10] sm:$0xff]
  %v31 = vld [vmem:[%s0 + $0x18] sm:$0xff]
  %v32 = vld [vmem:[%s0 + $0x20] sm:$0xff]
  %v33 = vld [vmem:[%s0 + $0x28] sm:$0xff]
  %v34 = vld [vmem:[%s0 + $0x30] sm:$0xff]
  %v35 = vld [vmem:[%s0 + $0x38] sm:$0xff]
  %v36 = vld [vmem:[%s0 + $0x40] sm:$0xff]
  %v37 = vld [vmem:[%s0 + $0x48] sm:$0xff]
  %v38 = vld [vmem:[%s0 + $0x50] sm:$0xff]
  %v39 = vld [vmem:[%s0 + $0x58] sm:$0xff]
  %v40 = vld [vmem:[%s0 + $0x60] sm:$0xff]
  %v41 = vld [vmem:[%s0 + $0x68] sm:$0xff]
  %v42 = vld [vmem:[%s0 + $0x70] sm:$0xff]
  %v43 = vld [vmem:[%s0 + $0x78] sm:$0xff]
  %v44 = vld [vmem:[%s2] sm:$0xff]
  %v45 = vld [vmem:[%s2 + $0x8] sm:$0xff]
  %v46 = vld [vmem:[%s2 + $0x10] sm:$0xff]
  %v47 = vld [vmem:[%s2 + $0x18] sm:$0xff]
  %v48 = vld [vmem:[%s2 + $0x20] sm:$0xff]
  %v49 = vld [vmem:[%s2 + $0x28] sm:$0xff]
  %v50 = vld [vmem:[%s2 + $0x30] sm:$0xff]
  %v51 = vld [vmem:[%s2 + $0x38] sm:$0xff]
  %53 = vset.pattern.permute.xlu0 0
  %54 = vperm.xlu0 %53, %v44
  %v55 = vpop.permute.xlu0 %54
  %58 = vset.pattern.permute.xlu0 0
  %59 = vperm.xlu0 %58, %v45
  %v60 = vpop.permute.xlu0 %59
  %63 = vset.pattern.permute.xlu0 0
  %64 = vperm.xlu0 %63, %v46
  %v65 = vpop.permute.xlu0 %64
  %68 = vset.pattern.permute.xlu0 0
  %69 = vperm.xlu0 %68, %v47
  %v70 = vpop.permute.xlu0 %69
  %73 = vset.pattern.permute.xlu0 0
  %74 = vperm.xlu0 %73, %v48
  %v75 = vpop.permute.xlu0 %74
  %78 = vset.pattern.permute.xlu0 0
  %79 = vperm.xlu0 %78, %v49
  %v80 = vpop.permute.xlu0 %79
  %83 = vset.pattern.permute.xlu0 0
  %84 = vperm.xlu0 %83, %v50
  %v85 = vpop.permute.xlu0 %84
  %88 = vset.pattern.permute.xlu0 0
  %89 = vperm.xlu0 %88, %v51
  %v90 = vpop.permute.xlu0 %89
  %vm92 = vcmask 97280
  %v94 = vsel %vm92, %v20, 0
  %v97 = vsel %vm92, %v21, 0
  %v100 = vsel %vm92, %v22, 0
  %v103 = vsel %vm92, %v23, 0
  %v106 = vsel %vm92, %v24, 0
  %v109 = vsel %vm92, %v25, 0
  %v112 = vsel %vm92, %v26, 0
  %v115 = vsel %vm92, %v27, 0
  %v118 = vsel %vm92, %v28, 0
  %v121 = vsel %vm92, %v29, 0
  %v124 = vsel %vm92, %v30, 0
  %v127 = vsel %vm92, %v31, 0
  %v130 = vsel %vm92, %v32, 0
  %v133 = vsel %vm92, %v33, 0
  %v136 = vsel %vm92, %v34, 0
  %v139 = vsel %vm92, %v35, 0
  %v142 = vsel %vm92, %v36, 0
  %v145 = vsel %vm92, %v37, 0
  %v148 = vsel %vm92, %v38, 0
  %v151 = vsel %vm92, %v39, 0
  %v154 = vsel %vm92, %v40, 0
  %v157 = vsel %vm92, %v41, 0
  %v160 = vsel %vm92, %v42, 0
  %v163 = vsel %vm92, %v43, 0
  %165 = vmatpush.xpose.msra.mxu0 %v163
  %166 = vmatpush.xpose.msra.mxu0 %v160
  %167 = vmatpush.xpose.msra.mxu0 %v157
  %168 = vmatpush.xpose.msra.mxu0 %v154
  %169 = vmatpush.xpose.msra.mxu0 %v151
  %170 = vmatpush.xpose.msra.mxu0 %v148
  %171 = vmatpush.xpose.msra.mxu0 %v145
  %172 = vmatpush.xpose.msra.mxu0 %v142
  %173 = vmatpush.xpose.msra.mxu0 %v139
  %174 = vmatpush.xpose.msra.mxu0 %v136
  %175 = vmatpush.xpose.msra.mxu0 %v133
  %176 = vmatpush.xpose.msra.mxu0 %v130
  %177 = vmatpush.xpose.msra.mxu0 %v127
  %178 = vmatpush.xpose.msra.mxu0 %v124
  %179 = vmatpush.xpose.msra.mxu0 %v121
  %180 = vmatpush.xpose.msra.mxu0 %v118
  %181 = vmatmul.f32.gmra.mxu0 %v94
  %v182 = vpop.f32.mrf.mxu0
  %v183 = vadd.f32 %v55, %v182
  %184 = vmatmul.f32.gmra.mxu0 %v97
  %v185 = vpop.f32.mrf.mxu0
  %v186 = vadd.f32 %v60, %v185
  %187 = vmatmul.f32.gmra.mxu0 %v100
  %v188 = vpop.f32.mrf.mxu0
  %v189 = vadd.f32 %v65, %v188
  %190 = vmatmul.f32.gmra.mxu0 %v103
  %v191 = vpop.f32.mrf.mxu0
  %v192 = vadd.f32 %v70, %v191
  %193 = vmatmul.f32.gmra.mxu0 %v106
  %v194 = vpop.f32.mrf.mxu0
  %v195 = vadd.f32 %v75, %v194
  %196 = vmatmul.f32.gmra.mxu0 %v109
  %v197 = vpop.f32.mrf.mxu0
  %v198 = vadd.f32 %v80, %v197
  %199 = vmatmul.f32.gmra.mxu0 %v112
  %v200 = vpop.f32.mrf.mxu0
  %v201 = vadd.f32 %v85, %v200
  %202 = vmatmul.f32.gmra.mxu0 %v115
  %v203 = vpop.f32.mrf.mxu0
  %v204 = vadd.f32 %v90, %v203
  %205 = vdwg.mxu0
  %v206 = vmax.f32 %v183, 0.0
  %v207 = vmax.f32 %v186, 0.0
  %v208 = vmax.f32 %v189, 0.0
  %v209 = vmax.f32 %v192, 0.0
  %v210 = vmax.f32 %v195, 0.0
  %v211 = vmax.f32 %v198, 0.0
  %v212 = vmax.f32 %v201, 0.0
  %v213 = vmax.f32 %v204, 0.0
  %v214 = vld [vmem:[%s3] sm:$0x3]
  %v215 = vld [vmem:[%s4] sm:$0x3]
  %217 = vset.pattern.permute.xlu0 0
  %218 = vperm.xlu0 %217, %v215
  %v219 = vpop.permute.xlu0 %218
  %vm221 = vcmask 523264
  %v223 = vsel %vm221, %v214, 0
  %225 = vmatpush.msra.mxu0 0.0
  %226 = vmatpush.msra.mxu0 0.0
  %227 = vmatpush.msra.mxu0 0.0
  %228 = vmatpush.msra.mxu0 0.0
  %229 = vmatpush.msra.mxu0 0.0
  %230 = vmatpush.msra.mxu0 0.0
  %231 = vmatpush.msra.mxu0 0.0
  %232 = vmatpush.msra.mxu0 0.0
  %233 = vmatpush.msra.mxu0 %v213
  %234 = vmatpush.msra.mxu0 %v212
  %235 = vmatpush.msra.mxu0 %v211
  %236 = vmatpush.msra.mxu0 %v210
  %237 = vmatpush.msra.mxu0 %v209
  %238 = vmatpush.msra.mxu0 %v208
  %239 = vmatpush.msra.mxu0 %v207
  %240 = vmatpush.msra.mxu0 %v206
  %241 = vmatmul.f32.gmra.mxu0 %v223
  %v242 = vpop.f32.mrf.mxu0
  %v243 = vadd.f32 %v219, %v242
  %244 = vdwg.mxu0
  %v245 = vxor.u32 %v243, 2147483648
  %v246 = vmul.f32 %v245, 1.442695
  %v247 = vpow.pop %v246
  %v248 = vadd.f32 %v247, 1.0
  %v249 = vrcp.pop %v248
  %v250 = vmul.f32 %v248, %v249
  %v251 = vsub.f32 1.0, %v250
  %v252 = vmul.f32 %v249, %v251
  %v253 = vadd.f32 %v249, %v252
  %vm254 = vweird.f32 %v248
  %vm255 = vweird.f32 %v249
  %vm256 = vmor %vm254, %vm255
  %v257 = vsel %vm256, %v249, %v253
  %v258 = vand.u32 2147483647, %v248
  %vm259 = vcmp.eq.f32.partialorder %v258, 8.507059e+37
  %v260 = vand.u32 %v248, 2147483648
  %v261 = vor.u32 1.1754944e-38, %v260
  %v262 = vsel %vm259, %v261, %v257
  %v263 = vmul.f32 1.0, %v262
  %264 = vst [vmem:[%s5] sm:$0x3] %v263
  // Predicated region
  $region22: #{dnn_forward_pallas.1} parent=0 // pred_check
    _
  $region23: #{dnn_forward_pallas.1} parent=0 // pred_check_branch
    %266 = sbr.rel (0) target = $region25
  $region24: #{dnn_forward_pallas.1} parent=0 // pred_region
    _
  $region25: #{dnn_forward_pallas.1} parent=0 // pred_fallthru
    _
  // Predicated region
  $region26: #{dnn_forward_pallas.1} parent=0 // pred_check
    _
  $region27: #{dnn_forward_pallas.1} parent=0 // pred_check_branch
    %268 = sbr.rel (0) target = $region29
  $region28: #{dnn_forward_pallas.1} parent=0 // pred_region
    _
  $region29: #{dnn_forward_pallas.1} parent=0 // pred_fallthru
    _

</llo_original>
